<compile_context>
chip_gen: v7x
topology: tpu7x:2x2x1
jax: 0.10.0
libtpu: 0.0.40
codegen_flags: <defaults>
</compile_context>

<pallas_src>
import jax
import jax.numpy as jnp
from jax.experimental import pallas as pl
from jax.experimental.pallas import tpu as pltpu


_SUB = 32                       # sublane multiple covering f32(8)/bf16(16)/int8(32) packing
_TARGET_BLOCK_BYTES = 2 << 20   # ~2 MiB per block -> ~85-90% of HBM roofline on all gens


def _sign_kernel(flag_ref, x_ref, o_ref):
    """flag_ref: (1,) int32 in SMEM (scalar prefetch). 1 -> negate, 0 -> copy."""
    x = x_ref[...]

    @pl.when(flag_ref[0] != 0)
    def _():
        o_ref[...] = -x

    @pl.when(flag_ref[0] == 0)
    def _():
        o_ref[...] = x


def _round_up(n: int, m: int) -> int:
    return ((n + m - 1) // m) * m


def _choose_lane(n: int) -> int:
    # Prefer a 128-multiple divisor of n so no padding / trailing slice is needed.
    for lane in (512, 256, 128):
        if n % lane == 0:
            return lane
    return 512  # fallback: pad the last (partial) lane row only


def _apply_sign(x: jnp.ndarray, flag: jnp.ndarray) -> jnp.ndarray:
    """Stream x through the kernel once, negating iff flag != 0."""
    orig_shape = x.shape
    n = x.size
    lane = _choose_lane(n)
    rows = -(-n // lane)
    pad = rows * lane - n

    xf = x.reshape(-1)
    if pad:
        xf = jnp.pad(xf, (0, pad))          # at most lane-1 extra elements
    x2 = xf.reshape(rows, lane)

    itemsize = jnp.dtype(x.dtype).itemsize
    if rows <= 2 * _SUB:
        # Tiny input: one full-array block (exempt from the (8,128) rule).
        tr = rows
    else:
        # Byte-targeted tile, rounded to the sublane multiple; capped so the grid
        # has at least 2 iterations (lets v7x split the stream across its 2 TCs).
        tr_target = max(_SUB, (_TARGET_BLOCK_BYTES // (lane * itemsize)) // _SUB * _SUB)
        tr = min(tr_target, _round_up(pl.cdiv(rows, 2), _SUB))

    grid = (pl.cdiv(rows, tr),)             # partial last block handled by Pallas

    out2 = pl.pallas_call(
        _sign_kernel,
        out_shape=jax.ShapeDtypeStruct((rows, lane), x.dtype),
        grid_spec=pltpu.PrefetchScalarGridSpec(
            num_scalar_prefetch=1,
            grid=grid,
            in_specs=[pl.BlockSpec((tr, lane), lambda i, flag: (i, 0))],
            out_specs=pl.BlockSpec((tr, lane), lambda i, flag: (i, 0)),
        ),
        compiler_params=pltpu.CompilerParams(
            dimension_semantics=("parallel",),
        ),
    )(flag, x2)

    if pad:
        return out2.reshape(-1)[:n].reshape(orig_shape)
    return out2.reshape(orig_shape)


def negation(x: jnp.ndarray, probability: float = 1.0, key=None) -> jnp.ndarray:
    """Apply negation to `x` with probability `probability` (uniform draw)."""
    if key is None:
        key = jax.random.PRNGKey(0)
    if x.size == 0:
        return x
    u = jax.random.uniform(key, ())
    do_negate = jnp.asarray(probability, jnp.float32) > u
    flag = do_negate.astype(jnp.int32).reshape(1)
    return _apply_sign(x, flag)


if __name__ == "__main__":
    key = jax.random.PRNGKey(0)
    k_data, k_draw, k_odd, k_big = jax.random.split(key, 4)

    # Small NCHW-style input consistent with an elementwise augmentation.
    x = jax.random.normal(k_data, (2, 4, 16, 16), dtype=jnp.float32)
    u = jax.random.uniform(k_draw, ())

    # probability = 1.0 (module default) -> negate path.
    out = jax.block_until_ready(negation(x, probability=1.0, key=k_draw))
    expected = jnp.where(jnp.asarray(1.0, jnp.float32) > u, -x, x)
    assert out.shape == x.shape and out.dtype == x.dtype
    assert jnp.allclose(out, expected), "mismatch vs reference (negate path)"

    # probability = 0.0 -> identity path (flag=0, still a single one-pass stream).
    out_id = jax.block_until_ready(negation(x, probability=0.0, key=k_draw))
    assert jnp.allclose(out_id, x), "mismatch vs reference (identity path)"

    # Odd, non-128-multiple size exercises the pad / partial-lane fallback.
    y = jax.random.normal(k_odd, (3, 5, 7), dtype=jnp.float32)
    out_y = jax.block_until_ready(negation(y, probability=1.0, key=k_draw))
    assert jnp.allclose(out_y, -y), "mismatch vs reference (padded path)"

    # Larger input exercises the real multi-block pipelined path (grid >= 2).
    z = jax.random.normal(k_big, (16, 64, 512), dtype=jnp.float32)
    out_z = jax.block_until_ready(negation(z, probability=1.0, key=k_draw))
    assert jnp.allclose(out_z, -z), "mismatch vs reference (tiled path)"

    # bf16 exercises the dtype-aware (byte-targeted) block sizing.
    xb = x.astype(jnp.bfloat16)
    out_b = jax.block_until_ready(negation(xb, probability=1.0, key=k_draw))
    assert out_b.dtype == jnp.bfloat16
    assert jnp.allclose(out_b.astype(jnp.float32), (-xb).astype(jnp.float32)), \
        "mismatch vs reference (bf16 path)"

    print("KERNEL_OK")
</pallas_src>

<mosaic_0001>
module attributes {stable_mosaic.version = 11 : i64} {
  func.func @_sign_kernel(%arg0: i32, %arg1: memref<1xi32, #tpu.memory_space<smem>>, %arg2: memref<4x512xf32, #tpu.memory_space<vmem>>, %arg3: memref<4x512xf32, #tpu.memory_space<vmem>>) attributes {dimension_semantics = [#tpu.dimension_semantics<parallel>], iteration_bounds = array<i64: 1>, scalar_prefetch = 1 : i64, scratch_operands = 0 : i64, tpu.core_type = #tpu.core_type<tc>, window_params = [{transform_indices = @transform_0, window_bounds = array<i64: 4, 512>}, {transform_indices = @transform_1, window_bounds = array<i64: 4, 512>}]} {
    %c0 = arith.constant 0 : index
    %c0_0 = arith.constant 0 : index
    %0 = vector.load %arg2[%c0, %c0_0] : memref<4x512xf32, #tpu.memory_space<vmem>>, vector<4x512xf32>
    %c0_1 = arith.constant 0 : index
    %1 = memref.load %arg1[%c0_1] : memref<1xi32, #tpu.memory_space<smem>>
    %c0_i32 = arith.constant 0 : i32
    %2 = arith.cmpi ne, %1, %c0_i32 : i32
    %3 = arith.extui %2 : i1 to i32
    %c0_i32_2 = arith.constant 0 : i32
    %4 = arith.cmpi ne, %3, %c0_i32_2 : i32
    scf.if %4 {
      %cst = arith.constant 0.000000e+00 : f32
      %9 = vector.broadcast %cst : f32 to vector<4x512xf32>
      %10 = arith.subf %9, %0 : vector<4x512xf32>
      %c0_6 = arith.constant 0 : index
      %c0_7 = arith.constant 0 : index
      %11 = vector.load %arg3[%c0_6, %c0_7] : memref<4x512xf32, #tpu.memory_space<vmem>>, vector<4x512xf32>
      tpu.vector_store %arg3[%c0_6, %c0_7], %10 {strides = array<i32>} : memref<4x512xf32, #tpu.memory_space<vmem>>, vector<4x512xf32>,
    } else {
    }
    %c0_3 = arith.constant 0 : index
    %5 = memref.load %arg1[%c0_3] : memref<1xi32, #tpu.memory_space<smem>>
    %c0_i32_4 = arith.constant 0 : i32
    %6 = arith.cmpi eq, %5, %c0_i32_4 : i32
    %7 = arith.extui %6 : i1 to i32
    %c0_i32_5 = arith.constant 0 : i32
    %8 = arith.cmpi ne, %7, %c0_i32_5 : i32
    scf.if %8 {
      %c0_6 = arith.constant 0 : index
      %c0_7 = arith.constant 0 : index
      %9 = vector.load %arg3[%c0_6, %c0_7] : memref<4x512xf32, #tpu.memory_space<vmem>>, vector<4x512xf32>
      tpu.vector_store %arg3[%c0_6, %c0_7], %0 {strides = array<i32>} : memref<4x512xf32, #tpu.memory_space<vmem>>, vector<4x512xf32>,
    } else {
    }
    return
  }
  func.func @transform_0(%arg0: i32, %arg1: memref<1xi32, #tpu.memory_space<smem>>) -> (i32, i32) {
    %c0_i32 = arith.constant 0 : i32
    %c0_i32_0 = arith.constant 0 : i32
    return %arg0, %c0_i32 : i32, i32
  }
  func.func @transform_1(%arg0: i32, %arg1: memref<1xi32, #tpu.memory_space<smem>>) -> (i32, i32) {
    %c0_i32 = arith.constant 0 : i32
    %c0_i32_0 = arith.constant 0 : i32
    return %arg0, %c0_i32 : i32, i32
  }
}

</mosaic_0001>

<llo_original>
// kernel: tpu_custom_call.1
$region0: #{tpu_custom_call.1}
  #allocation0 [shape = 'u32[]', space=smem, size = 0x4, offset = 0x4, fixed_abs, tag = 'smem constant byte address 0x4 - core index']
  #allocation1 [shape = 'u32[144,128]{1,0:T(1,128)}', space=vmem, size = 0x12000, scoped, tag = 'internal scratch']
  #allocation2 [shape = 's32[1]{0}', space=sflag, size = 0x4, scoped, tag = 'scoped memory for tpu_custom_call.1']
  #allocation3 [shape = 's32[1]{0:T(128)S(6)}', space=smem, size = 0x200, scoped, tag = 'prefetched SMEM operand 0']
  %s0 = inlined_call_operand.<no memory space> [shape: s32[1], index: 0, kind: input, shape index: {}]
  %s1 = inlined_call_operand.hbm [shape: f32[4,512], index: 1, kind: input, shape index: {}]
  %s2 = inlined_call_operand.hbm [shape: f32[4,512], index: 2, kind: output, shape index: {}]
  %s3 = sld [smem:[#allocation0]]
  $region26: #{tpu_custom_call.1} parent=0
    _
  %s5 = ssub.s32 1, %s3
  %s6 = scalar_select 0, %s5, %s3
  %7 = sst [smem:[#allocation3]] %s0
  $region1: #{tpu_custom_call.1} parent=0
    #allocation4 [shape = 'u8[8192]{0}', space=vmem, size = 0x2000, scoped, tag = 'input window, operand 1, single buffered']
    #allocation5 [shape = 's32[1]{0}', space=sflag, size = 0x4, scoped, tag = 'scoped memory for tpu_custom_call.1']
    #allocation6 [shape = 's32[1]{0}', space=sflag, size = 0x4, scoped, tag = 'scoped memory for tpu_custom_call.1']
    #allocation7 [shape = 'u8[8192]{0}', space=vmem, size = 0x2000, scoped, tag = 'output window, operand 0, single buffered']
    %8 = vsyncpa [#allocation5], 0
    %9 = vsyncpa [#allocation6], 0
    // Predicated region
    $region2: #{tpu_custom_call.1} parent=1 // pred_check
      _
    $region3: #{tpu_custom_call.1} parent=1 // pred_check_branch
      %11 = sbr.rel (0) target = $region5
    $region4: #{tpu_custom_call.1} parent=1 // pred_region
      %s13 = ssub.s32 256, 256
      %14 = vsyncadd [#allocation5], %s13
      %s16 = sshll.u32 [#allocation4], 4
      %s17 = int_to_ptr.vmem [resolvable:$true] %s16
      %19 = dma.hbm_to_vmem [thread:$0]  %s1, 256, %s17, [#allocation5]
    $region5: #{tpu_custom_call.1} parent=1 // pred_fallthru
      _
    // Predicated region
    $region6: #{tpu_custom_call.1} parent=1 // pred_check
      _
    $region7: #{tpu_custom_call.1} parent=1 // pred_check_branch
      %21 = sbr.rel (0) target = $region9
    $region8: #{tpu_custom_call.1} parent=1 // pred_region
      %22 = dma.done [#allocation5], 256
    $region9: #{tpu_custom_call.1} parent=1 // pred_fallthru
      _
    %v23 = vld [vmem:[#allocation4] sm:$0xff]
    %v24 = vld [vmem:[#allocation4 + $0x8] sm:$0xff]
    %s25 = sld [smem:[#allocation3]]
    %p26 = scmp.ne.s32.totalorder %s25, 0
    // Predicated region
    $region10: #{tpu_custom_call.1} parent=1 // pred_check
      %p27 = pneg %p26
    $region11: #{tpu_custom_call.1} parent=1 // pred_check_branch
      %29 = sbr.rel (%p27) target = $region13
    $region12: #{tpu_custom_call.1} parent=1 // pred_region
      %v30 = vsub.f32 0.0, %v23
      %v31 = vsub.f32 0.0, %v24
      %32 = vst [vmem:[#allocation7] sm:$0xff] %v30
      %33 = vst [vmem:[#allocation7 + $0x8] sm:$0xff] %v31
    $region13: #{tpu_custom_call.1} parent=1 // pred_fallthru
      _
    %s34 = sld [smem:[#allocation3]]
    %p35 = scmp.eq.s32.totalorder %s34, 0
    // Predicated region
    $region14: #{tpu_custom_call.1} parent=1 // pred_check
      %p36 = pneg %p35
    $region15: #{tpu_custom_call.1} parent=1 // pred_check_branch
      %38 = sbr.rel (%p36) target = $region17
    $region16: #{tpu_custom_call.1} parent=1 // pred_region
      %39 = vst [vmem:[#allocation7] sm:$0xff] %v23
      %40 = vst [vmem:[#allocation7 + $0x8] sm:$0xff] %v24
    $region17: #{tpu_custom_call.1} parent=1 // pred_fallthru
      _
    // Predicated region
    $region18: #{tpu_custom_call.1} parent=1 // pred_check
      _
    $region19: #{tpu_custom_call.1} parent=1 // pred_check_branch
      %42 = sbr.rel (0) target = $region21
    $region20: #{tpu_custom_call.1} parent=1 // pred_region
      %s44 = ssub.s32 256, 256
      %45 = vsyncadd [#allocation6], %s44
      %s47 = sshll.u32 [#allocation7], 4
      %s48 = int_to_ptr.vmem [resolvable:$true] %s47
      %50 = dma.vmem_to_hbm [thread:$0]  %s48, 256, %s2, [#allocation6]
    $region21: #{tpu_custom_call.1} parent=1 // pred_fallthru
      _
    // Predicated region
    $region22: #{tpu_custom_call.1} parent=1 // pred_check
      _
    $region23: #{tpu_custom_call.1} parent=1 // pred_check_branch
      %52 = sbr.rel (0) target = $region25
    $region24: #{tpu_custom_call.1} parent=1 // pred_region
      %53 = dma.done [#allocation6], 256
    $region25: #{tpu_custom_call.1} parent=1 // pred_fallthru
      _
    %54 = vsyncpa [#allocation5], 1
    %55 = vsyncpa [#allocation6], 1

</llo_original>
